<compile_context>
chip_gen: v5e
topology: v5e:2x2
jax: 0.10.0
libtpu: 0.0.40
codegen_flags: <defaults>
</compile_context>

<pallas_src>
import functools
import math

import jax
import jax.numpy as jnp
import numpy as np
from jax.experimental import pallas as pl
from jax.experimental.pallas import tpu as pltpu


# --------------------------- fused attention kernel --------------------------

def _fused_attn_kernel(xq_ref, xkv_ref, wq_ref, wkv_ref, wo_ref, o_ref, *,
                       n_heads, scale):
    # One batch element per grid step; everything stays in VMEM.
    xq = xq_ref[0]                                   # (L, D) f32
    xkv = xkv_ref[0]                                 # (S, D) f32
    L, D = xq.shape
    Dh = D // n_heads

    xq_b = xq.astype(jnp.bfloat16)
    xkv_b = xkv.astype(jnp.bfloat16)

    # Q projection (bf16 MXU, f32 accumulate); KV projection as ONE stacked matmul.
    q = jnp.dot(xq_b, wq_ref[...], preferred_element_type=jnp.float32)    # (L, D)
    kv = jnp.dot(xkv_b, wkv_ref[...], preferred_element_type=jnp.float32)  # (S, 2D)
    k = kv[:, :D]
    v = kv[:, D:]

    # Per-head attention, heads split inside the kernel (static loop).
    ctxs = []
    for h in range(n_heads):
        sl = slice(h * Dh, (h + 1) * Dh)
        qh = q[:, sl].astype(jnp.bfloat16)            # (L, Dh)
        kh = k[:, sl].astype(jnp.bfloat16)            # (S, Dh)
        vh = v[:, sl].astype(jnp.bfloat16)            # (S, Dh)
        s = jax.lax.dot_general(
            qh, kh, dimension_numbers=(((1,), (1,)), ((), ())),
            preferred_element_type=jnp.float32,
        ) * scale                                     # (L, S) f32
        s = s - jnp.max(s, axis=-1, keepdims=True)
        e = jnp.exp(s)
        inv = pl.reciprocal(jnp.sum(e, axis=-1, keepdims=True), approx=True)
        p = e * inv                                   # f32 softmax
        ctxs.append(jnp.dot(p.astype(jnp.bfloat16), vh,
                            preferred_element_type=jnp.float32))  # (L, Dh)
    ctx = jnp.concatenate(ctxs, axis=-1)              # (L, D) lane-dense

    # Output projection + residual, fused; lane-dense (L, D) store.
    attn_o = jnp.dot(ctx.astype(jnp.bfloat16), wo_ref[...],
                     preferred_element_type=jnp.float32)          # (L, D)
    o_ref[0] = (xq + attn_o).astype(o_ref.dtype)


def fused_attention(x_q, x_kv, p, n_heads, t=None, attn_mask=None):
    # TODO(synk): `t` and attn_mask are accepted for signature parity with the
    # injected attention modules but are unused by this full-attention variant.
    B, L, D = x_q.shape
    S = x_kv.shape[1]
    scale = 1.0 / math.sqrt(D // n_heads)

    # Store/DMA weights as bf16 (halves weight traffic; f32 accumulation).
    wq = p["wq"].astype(jnp.bfloat16)
    wkv = p["wkv"].astype(jnp.bfloat16)
    wo = p["wo"].astype(jnp.bfloat16)

    kernel = functools.partial(_fused_attn_kernel, n_heads=n_heads, scale=scale)
    return pl.pallas_call(
        kernel,
        out_shape=jax.ShapeDtypeStruct((B, L, D), jnp.float32),
        grid=(B,),
        in_specs=[
            pl.BlockSpec((1, L, D), lambda b: (b, 0, 0)),
            pl.BlockSpec((1, S, D), lambda b: (b, 0, 0)),
            pl.BlockSpec((D, D), lambda b: (0, 0)),
            pl.BlockSpec((D, 2 * D), lambda b: (0, 0)),
            pl.BlockSpec((D, D), lambda b: (0, 0)),
        ],
        out_specs=pl.BlockSpec((1, L, D), lambda b: (b, 0, 0)),
        compiler_params=pltpu.CompilerParams(dimension_semantics=("parallel",)),
    )(x_q, x_kv, wq, wkv, wo)


# --------------------------- fused FFN kernel ---------------------------------

def _ffn_kernel(y_ref, w1_ref, w2_ref, o_ref):
    # conv1(k=1) -> relu -> conv2(k=1), fused per row-tile of (B*L, D).
    y = y_ref[...].astype(jnp.bfloat16)                              # (tm, D)
    h = jnp.dot(y, w1_ref[...], preferred_element_type=jnp.float32)  # (tm, F)
    h = jnp.maximum(h, 0.0)                                          # F.relu
    o_ref[...] = jnp.dot(h.astype(jnp.bfloat16), w2_ref[...],
                         preferred_element_type=jnp.float32).astype(o_ref.dtype)


def ffn_pallas(y, w1, w2, *, tm=256):
    B, L, D = y.shape
    F_ = w1.shape[1]
    BL = B * L
    y2 = y.reshape(BL, D)
    tm = min(tm, BL)

    w1_b = w1.astype(jnp.bfloat16)
    w2_b = w2.astype(jnp.bfloat16)

    out = pl.pallas_call(
        _ffn_kernel,
        out_shape=jax.ShapeDtypeStruct((BL, D), jnp.float32),
        grid=(pl.cdiv(BL, tm),),
        in_specs=[
            pl.BlockSpec((tm, D), lambda i: (i, 0)),
            pl.BlockSpec((D, F_), lambda i: (0, 0)),   # weights resident
            pl.BlockSpec((F_, D), lambda i: (0, 0)),
        ],
        out_specs=pl.BlockSpec((tm, D), lambda i: (i, 0)),
        compiler_params=pltpu.CompilerParams(dimension_semantics=("parallel",)),
    )(y2, w1_b, w2_b)
    return out.reshape(B, L, D)


# --------------------------- module forward ---------------------------------

def decoder_layer_forward(x, cross, t, params, *, n_heads):
    # dropout == identity (eval mode)
    x = fused_attention(x, x, params["self_attn"], n_heads, t)        # x + self_attn(x)
    y = fused_attention(x, cross, params["cross_attn"], n_heads, t)   # x + cross_attn(x, cross)
    y = ffn_pallas(y, params["w1"], params["w2"])
    # TODO(synk): self.projection (circular Conv1d, k=3) exists in __init__ but
    # is not applied in forward(), so it is intentionally omitted here.
    return y


# --------------------------- pure-JAX reference ------------------------------
# Mirrors the kernel's bf16-operand / f32-accumulate numerics.

def _ref_attn_block(xq, xkv, p, n_heads):
    B, L, D = xq.shape
    S = xkv.shape[1]
    Dh = D // n_heads
    scale = 1.0 / math.sqrt(Dh)
    wq = p["wq"].astype(jnp.bfloat16)
    wk = p["wkv"][:, :D].astype(jnp.bfloat16)
    wv = p["wkv"][:, D:].astype(jnp.bfloat16)
    wo = p["wo"].astype(jnp.bfloat16)

    q = jnp.einsum("bld,de->ble", xq.astype(jnp.bfloat16), wq,
                   preferred_element_type=jnp.float32)
    k = jnp.einsum("bsd,de->bse", xkv.astype(jnp.bfloat16), wk,
                   preferred_element_type=jnp.float32)
    v = jnp.einsum("bsd,de->bse", xkv.astype(jnp.bfloat16), wv,
                   preferred_element_type=jnp.float32)

    qh = q.reshape(B, L, n_heads, Dh)
    kh = k.reshape(B, S, n_heads, Dh)
    vh = v.reshape(B, S, n_heads, Dh)
    s = jnp.einsum("blhd,bshd->bhls", qh.astype(jnp.bfloat16),
                   kh.astype(jnp.bfloat16),
                   preferred_element_type=jnp.float32) * scale
    a = jax.nn.softmax(s, axis=-1)
    ctx = jnp.einsum("bhls,bshd->blhd", a.astype(jnp.bfloat16),
                     vh.astype(jnp.bfloat16),
                     preferred_element_type=jnp.float32).reshape(B, L, D)
    o = jnp.einsum("bld,de->ble", ctx.astype(jnp.bfloat16), wo,
                   preferred_element_type=jnp.float32)
    return xq + o


def ref_forward(x, cross, params, n_heads):
    x = _ref_attn_block(x, x, params["self_attn"], n_heads)
    y = _ref_attn_block(x, cross, params["cross_attn"], n_heads)
    w1 = params["w1"].astype(jnp.bfloat16)
    w2 = params["w2"].astype(jnp.bfloat16)
    h = jnp.maximum(
        jnp.einsum("bld,df->blf", y.astype(jnp.bfloat16), w1,
                   preferred_element_type=jnp.float32), 0.0)
    return jnp.einsum("blf,fd->bld", h.astype(jnp.bfloat16), w2,
                      preferred_element_type=jnp.float32)


# --------------------------- parameter init ----------------------------------

def init_params(key, d_model, d_ff, n_heads):
    def w(k, shape, fan_in):
        return (jax.random.normal(k, shape, jnp.float32) /
                np.sqrt(fan_in)).astype(jnp.float32)

    ks = jax.random.split(key, 8)

    def attn(k3):
        return {
            "wq":  w(k3[0], (d_model, d_model), d_model),
            "wkv": w(k3[1], (d_model, 2 * d_model), d_model),   # stacked K|V
            "wo":  w(k3[2], (d_model, d_model), d_model),
        }

    return {
        "self_attn": attn(ks[0:3]),
        "cross_attn": attn(ks[3:6]),
        # conv1: Conv1d(d_model, d_ff, 1)  -> matmul weight [d_model, d_ff]
        "w1": w(ks[6], (d_model, d_ff), d_model),
        # conv2: Conv1d(d_ff, d_model, 1)  -> matmul weight [d_ff, d_model]
        "w2": w(ks[7], (d_ff, d_model), d_ff),
    }


# --------------------------- main --------------------------------------------

if __name__ == "__main__":
    B, L, S = 2, 8, 8
    d_model, n_heads = 32, 4
    d_ff = 4 * d_model            # default d_ff = 4 * d_model
    c_out = 7                     # projection head exists but is unused in forward

    key = jax.random.PRNGKey(0)
    kx, kc, kt, kp = jax.random.split(key, 4)
    x = 0.1 * jax.random.normal(kx, (B, L, d_model), jnp.float32)
    cross = 0.1 * jax.random.normal(kc, (B, S, d_model), jnp.float32)
    t = jax.random.normal(kt, (B, L), jnp.float32)   # passed through, unused

    params = init_params(kp, d_model, d_ff, n_heads)

    fwd = jax.jit(functools.partial(decoder_layer_forward, n_heads=n_heads))
    out = fwd(x, cross, t, params)
    out = jax.block_until_ready(out)

    ref = ref_forward(x, cross, params, n_heads)
    assert out.shape == (B, L, d_model), out.shape
    np.testing.assert_allclose(np.asarray(out), np.asarray(ref),
                               rtol=2e-2, atol=2e-2)

    print("KERNEL_OK")
</pallas_src>

<mosaic_0001>
module attributes {stable_mosaic.version = 11 : i64} {
  func.func @_fused_attn_kernel(%arg0: i32, %arg1: memref<1x8x32xf32, #tpu.memory_space<vmem>>, %arg2: memref<1x8x32xf32, #tpu.memory_space<vmem>>, %arg3: memref<32x32xbf16, #tpu.memory_space<vmem>>, %arg4: memref<32x64xbf16, #tpu.memory_space<vmem>>, %arg5: memref<32x32xbf16, #tpu.memory_space<vmem>>, %arg6: memref<1x8x32xf32, #tpu.memory_space<vmem>>) attributes {dimension_semantics = [#tpu.dimension_semantics<parallel>], iteration_bounds = array<i64: 2>, scalar_prefetch = 0 : i64, scratch_operands = 0 : i64, tpu.core_type = #tpu.core_type<tc>, window_params = [{transform_indices = @transform_0, window_bounds = array<i64: 1, 8, 32>}, {transform_indices = @transform_1, window_bounds = array<i64: 1, 8, 32>}, {pipeline_mode = #tpu.pipeline_mode<synchronous>, transform_indices = @transform_2, window_bounds = array<i64: 32, 32>}, {pipeline_mode = #tpu.pipeline_mode<synchronous>, transform_indices = @transform_3, window_bounds = array<i64: 32, 64>}, {pipeline_mode = #tpu.pipeline_mode<synchronous>, transform_indices = @transform_4, window_bounds = array<i64: 32, 32>}, {transform_indices = @transform_5, window_bounds = array<i64: 1, 8, 32>}]} {
    %c0 = arith.constant 0 : index
    %c0_0 = arith.constant 0 : index
    %c0_1 = arith.constant 0 : index
    %0 = vector.load %arg1[%c0, %c0_0, %c0_1] : memref<1x8x32xf32, #tpu.memory_space<vmem>>, vector<1x8x32xf32>
    %1 = vector.shape_cast %0 : vector<1x8x32xf32> to vector<8x32xf32>
    %c0_2 = arith.constant 0 : index
    %c0_3 = arith.constant 0 : index
    %c0_4 = arith.constant 0 : index
    %2 = vector.load %arg2[%c0_2, %c0_3, %c0_4] : memref<1x8x32xf32, #tpu.memory_space<vmem>>, vector<1x8x32xf32>
    %3 = vector.shape_cast %2 : vector<1x8x32xf32> to vector<8x32xf32>
    %4 = arith.truncf %1 : vector<8x32xf32> to vector<8x32xbf16>
    %5 = arith.truncf %3 : vector<8x32xf32> to vector<8x32xbf16>
    %c0_5 = arith.constant 0 : index
    %c0_6 = arith.constant 0 : index
    %6 = vector.load %arg3[%c0_5, %c0_6] : memref<32x32xbf16, #tpu.memory_space<vmem>>, vector<32x32xbf16>
    %cst = arith.constant dense<0.000000e+00> : vector<8x32xf32>
    %7 = tpu.matmul %4, %6, %cst {dimension_numbers = #tpu.dot_dimension_numbers<[1], [0], [0], [1], [0, 0, 1, 1], [], []>} : vector<8x32xbf16>, vector<32x32xbf16>, vector<8x32xf32> -> vector<8x32xf32>
    %c0_7 = arith.constant 0 : index
    %c0_8 = arith.constant 0 : index
    %8 = vector.load %arg4[%c0_7, %c0_8] : memref<32x64xbf16, #tpu.memory_space<vmem>>, vector<32x64xbf16>
    %cst_9 = arith.constant dense<0.000000e+00> : vector<8x64xf32>
    %9 = tpu.matmul %5, %8, %cst_9 {dimension_numbers = #tpu.dot_dimension_numbers<[1], [0], [0], [1], [0, 0, 1, 1], [], []>} : vector<8x32xbf16>, vector<32x64xbf16>, vector<8x64xf32> -> vector<8x64xf32>
    %10 = vector.extract_strided_slice %9 {offsets = [0, 0], sizes = [8, 32], strides = [1, 1]} : vector<8x64xf32> to vector<8x32xf32>
    %11 = vector.extract_strided_slice %9 {offsets = [0, 32], sizes = [8, 32], strides = [1, 1]} : vector<8x64xf32> to vector<8x32xf32>
    %12 = vector.extract_strided_slice %7 {offsets = [0, 0], sizes = [8, 8], strides = [1, 1]} : vector<8x32xf32> to vector<8x8xf32>
    %13 = arith.truncf %12 : vector<8x8xf32> to vector<8x8xbf16>
    %14 = vector.extract_strided_slice %10 {offsets = [0, 0], sizes = [8, 8], strides = [1, 1]} : vector<8x32xf32> to vector<8x8xf32>
    %15 = arith.truncf %14 : vector<8x8xf32> to vector<8x8xbf16>
    %16 = vector.extract_strided_slice %11 {offsets = [0, 0], sizes = [8, 8], strides = [1, 1]} : vector<8x32xf32> to vector<8x8xf32>
    %17 = arith.truncf %16 : vector<8x8xf32> to vector<8x8xbf16>
    %cst_10 = arith.constant dense<0.000000e+00> : vector<8x8xf32>
    %18 = tpu.matmul %13, %15, %cst_10 {dimension_numbers = #tpu.dot_dimension_numbers<[1], [1], [0], [0], [0, 0, 1, 0], [], []>} : vector<8x8xbf16>, vector<8x8xbf16>, vector<8x8xf32> -> vector<8x8xf32>
    %cst_11 = arith.constant 0.353553385 : f32
    %19 = vector.broadcast %cst_11 : f32 to vector<8x8xf32>
    %20 = arith.mulf %18, %19 : vector<8x8xf32>
    %cst_12 = arith.constant dense<0xFF800000> : vector<8xf32>
    %21 = vector.multi_reduction <maximumf>, %20, %cst_12 [1] : vector<8x8xf32> to vector<8xf32>
    %22 = vector.shape_cast %21 : vector<8xf32> to vector<8x1xf32>
    %23 = vector.broadcast %22 : vector<8x1xf32> to vector<8x8xf32>
    %24 = arith.subf %20, %23 : vector<8x8xf32>
    %25 = math.exp %24 : vector<8x8xf32>
    %cst_13 = arith.constant dense<0.000000e+00> : vector<8xf32>
    %26 = vector.multi_reduction <add>, %25, %cst_13 [1] : vector<8x8xf32> to vector<8xf32>
    %27 = vector.shape_cast %26 : vector<8xf32> to vector<8x1xf32>
    %28 = tpu.reciprocal %27 {approx = true} : vector<8x1xf32> -> vector<8x1xf32>
    %29 = vector.broadcast %28 : vector<8x1xf32> to vector<8x8xf32>
    %30 = arith.mulf %25, %29 : vector<8x8xf32>
    %31 = arith.truncf %30 : vector<8x8xf32> to vector<8x8xbf16>
    %cst_14 = arith.constant dense<0.000000e+00> : vector<8x8xf32>
    %32 = tpu.matmul %31, %17, %cst_14 {dimension_numbers = #tpu.dot_dimension_numbers<[1], [0], [0], [1], [0, 0, 1, 1], [], []>} : vector<8x8xbf16>, vector<8x8xbf16>, vector<8x8xf32> -> vector<8x8xf32>
    %33 = vector.extract_strided_slice %7 {offsets = [0, 8], sizes = [8, 8], strides = [1, 1]} : vector<8x32xf32> to vector<8x8xf32>
    %34 = arith.truncf %33 : vector<8x8xf32> to vector<8x8xbf16>
    %35 = vector.extract_strided_slice %10 {offsets = [0, 8], sizes = [8, 8], strides = [1, 1]} : vector<8x32xf32> to vector<8x8xf32>
    %36 = arith.truncf %35 : vector<8x8xf32> to vector<8x8xbf16>
    %37 = vector.extract_strided_slice %11 {offsets = [0, 8], sizes = [8, 8], strides = [1, 1]} : vector<8x32xf32> to vector<8x8xf32>
    %38 = arith.truncf %37 : vector<8x8xf32> to vector<8x8xbf16>
    %cst_15 = arith.constant dense<0.000000e+00> : vector<8x8xf32>
    %39 = tpu.matmul %34, %36, %cst_15 {dimension_numbers = #tpu.dot_dimension_numbers<[1], [1], [0], [0], [0, 0, 1, 0], [], []>} : vector<8x8xbf16>, vector<8x8xbf16>, vector<8x8xf32> -> vector<8x8xf32>
    %cst_16 = arith.constant 0.353553385 : f32
    %40 = vector.broadcast %cst_16 : f32 to vector<8x8xf32>
    %41 = arith.mulf %39, %40 : vector<8x8xf32>
    %cst_17 = arith.constant dense<0xFF800000> : vector<8xf32>
    %42 = vector.multi_reduction <maximumf>, %41, %cst_17 [1] : vector<8x8xf32> to vector<8xf32>
    %43 = vector.shape_cast %42 : vector<8xf32> to vector<8x1xf32>
    %44 = vector.broadcast %43 : vector<8x1xf32> to vector<8x8xf32>
    %45 = arith.subf %41, %44 : vector<8x8xf32>
    %46 = math.exp %45 : vector<8x8xf32>
    %cst_18 = arith.constant dense<0.000000e+00> : vector<8xf32>
    %47 = vector.multi_reduction <add>, %46, %cst_18 [1] : vector<8x8xf32> to vector<8xf32>
    %48 = vector.shape_cast %47 : vector<8xf32> to vector<8x1xf32>
    %49 = tpu.reciprocal %48 {approx = true} : vector<8x1xf32> -> vector<8x1xf32>
    %50 = vector.broadcast %49 : vector<8x1xf32> to vector<8x8xf32>
    %51 = arith.mulf %46, %50 : vector<8x8xf32>
    %52 = arith.truncf %51 : vector<8x8xf32> to vector<8x8xbf16>
    %cst_19 = arith.constant dense<0.000000e+00> : vector<8x8xf32>
    %53 = tpu.matmul %52, %38, %cst_19 {dimension_numbers = #tpu.dot_dimension_numbers<[1], [0], [0], [1], [0, 0, 1, 1], [], []>} : vector<8x8xbf16>, vector<8x8xbf16>, vector<8x8xf32> -> vector<8x8xf32>
    %54 = vector.extract_strided_slice %7 {offsets = [0, 16], sizes = [8, 8], strides = [1, 1]} : vector<8x32xf32> to vector<8x8xf32>
    %55 = arith.truncf %54 : vector<8x8xf32> to vector<8x8xbf16>
    %56 = vector.extract_strided_slice %10 {offsets = [0, 16], sizes = [8, 8], strides = [1, 1]} : vector<8x32xf32> to vector<8x8xf32>
    %57 = arith.truncf %56 : vector<8x8xf32> to vector<8x8xbf16>
    %58 = vector.extract_strided_slice %11 {offsets = [0, 16], sizes = [8, 8], strides = [1, 1]} : vector<8x32xf32> to vector<8x8xf32>
    %59 = arith.truncf %58 : vector<8x8xf32> to vector<8x8xbf16>
    %cst_20 = arith.constant dense<0.000000e+00> : vector<8x8xf32>
    %60 = tpu.matmul %55, %57, %cst_20 {dimension_numbers = #tpu.dot_dimension_numbers<[1], [1], [0], [0], [0, 0, 1, 0], [], []>} : vector<8x8xbf16>, vector<8x8xbf16>, vector<8x8xf32> -> vector<8x8xf32>
    %cst_21 = arith.constant 0.353553385 : f32
    %61 = vector.broadcast %cst_21 : f32 to vector<8x8xf32>
    %62 = arith.mulf %60, %61 : vector<8x8xf32>
    %cst_22 = arith.constant dense<0xFF800000> : vector<8xf32>
    %63 = vector.multi_reduction <maximumf>, %62, %cst_22 [1] : vector<8x8xf32> to vector<8xf32>
    %64 = vector.shape_cast %63 : vector<8xf32> to vector<8x1xf32>
    %65 = vector.broadcast %64 : vector<8x1xf32> to vector<8x8xf32>
    %66 = arith.subf %62, %65 : vector<8x8xf32>
    %67 = math.exp %66 : vector<8x8xf32>
    %cst_23 = arith.constant dense<0.000000e+00> : vector<8xf32>
    %68 = vector.multi_reduction <add>, %67, %cst_23 [1] : vector<8x8xf32> to vector<8xf32>
    %69 = vector.shape_cast %68 : vector<8xf32> to vector<8x1xf32>
    %70 = tpu.reciprocal %69 {approx = true} : vector<8x1xf32> -> vector<8x1xf32>
    %71 = vector.broadcast %70 : vector<8x1xf32> to vector<8x8xf32>
    %72 = arith.mulf %67, %71 : vector<8x8xf32>
    %73 = arith.truncf %72 : vector<8x8xf32> to vector<8x8xbf16>
    %cst_24 = arith.constant dense<0.000000e+00> : vector<8x8xf32>
    %74 = tpu.matmul %73, %59, %cst_24 {dimension_numbers = #tpu.dot_dimension_numbers<[1], [0], [0], [1], [0, 0, 1, 1], [], []>} : vector<8x8xbf16>, vector<8x8xbf16>, vector<8x8xf32> -> vector<8x8xf32>
    %75 = vector.extract_strided_slice %7 {offsets = [0, 24], sizes = [8, 8], strides = [1, 1]} : vector<8x32xf32> to vector<8x8xf32>
    %76 = arith.truncf %75 : vector<8x8xf32> to vector<8x8xbf16>
    %77 = vector.extract_strided_slice %10 {offsets = [0, 24], sizes = [8, 8], strides = [1, 1]} : vector<8x32xf32> to vector<8x8xf32>
    %78 = arith.truncf %77 : vector<8x8xf32> to vector<8x8xbf16>
    %79 = vector.extract_strided_slice %11 {offsets = [0, 24], sizes = [8, 8], strides = [1, 1]} : vector<8x32xf32> to vector<8x8xf32>
    %80 = arith.truncf %79 : vector<8x8xf32> to vector<8x8xbf16>
    %cst_25 = arith.constant dense<0.000000e+00> : vector<8x8xf32>
    %81 = tpu.matmul %76, %78, %cst_25 {dimension_numbers = #tpu.dot_dimension_numbers<[1], [1], [0], [0], [0, 0, 1, 0], [], []>} : vector<8x8xbf16>, vector<8x8xbf16>, vector<8x8xf32> -> vector<8x8xf32>
    %cst_26 = arith.constant 0.353553385 : f32
    %82 = vector.broadcast %cst_26 : f32 to vector<8x8xf32>
    %83 = arith.mulf %81, %82 : vector<8x8xf32>
    %cst_27 = arith.constant dense<0xFF800000> : vector<8xf32>
    %84 = vector.multi_reduction <maximumf>, %83, %cst_27 [1] : vector<8x8xf32> to vector<8xf32>
    %85 = vector.shape_cast %84 : vector<8xf32> to vector<8x1xf32>
    %86 = vector.broadcast %85 : vector<8x1xf32> to vector<8x8xf32>
    %87 = arith.subf %83, %86 : vector<8x8xf32>
    %88 = math.exp %87 : vector<8x8xf32>
    %cst_28 = arith.constant dense<0.000000e+00> : vector<8xf32>
    %89 = vector.multi_reduction <add>, %88, %cst_28 [1] : vector<8x8xf32> to vector<8xf32>
    %90 = vector.shape_cast %89 : vector<8xf32> to vector<8x1xf32>
    %91 = tpu.reciprocal %90 {approx = true} : vector<8x1xf32> -> vector<8x1xf32>
    %92 = vector.broadcast %91 : vector<8x1xf32> to vector<8x8xf32>
    %93 = arith.mulf %88, %92 : vector<8x8xf32>
    %94 = arith.truncf %93 : vector<8x8xf32> to vector<8x8xbf16>
    %cst_29 = arith.constant dense<0.000000e+00> : vector<8x8xf32>
    %95 = tpu.matmul %94, %80, %cst_29 {dimension_numbers = #tpu.dot_dimension_numbers<[1], [0], [0], [1], [0, 0, 1, 1], [], []>} : vector<8x8xbf16>, vector<8x8xbf16>, vector<8x8xf32> -> vector<8x8xf32>
    %96 = tpu.concatenate %32, %53, %74, %95 in 1 : vector<8x8xf32>, vector<8x8xf32>, vector<8x8xf32>, vector<8x8xf32> -> vector<8x32xf32>
    %97 = arith.truncf %96 : vector<8x32xf32> to vector<8x32xbf16>
    %c0_30 = arith.constant 0 : index
    %c0_31 = arith.constant 0 : index
    %98 = vector.load %arg5[%c0_30, %c0_31] : memref<32x32xbf16, #tpu.memory_space<vmem>>, vector<32x32xbf16>
    %cst_32 = arith.constant dense<0.000000e+00> : vector<8x32xf32>
    %99 = tpu.matmul %97, %98, %cst_32 {dimension_numbers = #tpu.dot_dimension_numbers<[1], [0], [0], [1], [0, 0, 1, 1], [], []>} : vector<8x32xbf16>, vector<32x32xbf16>, vector<8x32xf32> -> vector<8x32xf32>
    %100 = arith.addf %1, %99 : vector<8x32xf32>
    %c0_33 = arith.constant 0 : index
    %c0_34 = arith.constant 0 : index
    %c0_35 = arith.constant 0 : index
    %101 = vector.load %arg6[%c0_33, %c0_34, %c0_35] : memref<1x8x32xf32, #tpu.memory_space<vmem>>, vector<1x8x32xf32>
    %102 = vector.shape_cast %101 : vector<1x8x32xf32> to vector<8x32xf32>
    %103 = vector.shape_cast %100 : vector<8x32xf32> to vector<1x8x32xf32>
    tpu.vector_store %arg6[%c0_33, %c0_34, %c0_35], %103 {strides = array<i32>} : memref<1x8x32xf32, #tpu.memory_space<vmem>>, vector<1x8x32xf32>,
    return
  }
  func.func @transform_0(%arg0: i32) -> (i32, i32, i32) {
    %c0_i32 = arith.constant 0 : i32
    %c0_i32_0 = arith.constant 0 : i32
    %c0_i32_1 = arith.constant 0 : i32
    return %arg0, %c0_i32, %c0_i32_0 : i32, i32, i32
  }
  func.func @transform_1(%arg0: i32) -> (i32, i32, i32) {
    %c0_i32 = arith.constant 0 : i32
    %c0_i32_0 = arith.constant 0 : i32
    %c0_i32_1 = arith.constant 0 : i32
    return %arg0, %c0_i32, %c0_i32_0 : i32, i32, i32
  }
  func.func @transform_2(%arg0: i32) -> (i32, i32) {
    %c0_i32 = arith.constant 0 : i32
    %c0_i32_0 = arith.constant 0 : i32
    %c0_i32_1 = arith.constant 0 : i32
    return %c0_i32, %c0_i32_0 : i32, i32
  }
  func.func @transform_3(%arg0: i32) -> (i32, i32) {
    %c0_i32 = arith.constant 0 : i32
    %c0_i32_0 = arith.constant 0 : i32
    %c0_i32_1 = arith.constant 0 : i32
    return %c0_i32, %c0_i32_0 : i32, i32
  }
  func.func @transform_4(%arg0: i32) -> (i32, i32) {
    %c0_i32 = arith.constant 0 : i32
    %c0_i32_0 = arith.constant 0 : i32
    %c0_i32_1 = arith.constant 0 : i32
    return %c0_i32, %c0_i32_0 : i32, i32
  }
  func.func @transform_5(%arg0: i32) -> (i32, i32, i32) {
    %c0_i32 = arith.constant 0 : i32
    %c0_i32_0 = arith.constant 0 : i32
    %c0_i32_1 = arith.constant 0 : i32
    return %arg0, %c0_i32, %c0_i32_0 : i32, i32, i32
  }
}

module attributes {stable_mosaic.version = 11 : i64} {
  func.func @_ffn_kernel(%arg0: i32, %arg1: memref<16x32xf32, #tpu.memory_space<vmem>>, %arg2: memref<32x128xbf16, #tpu.memory_space<vmem>>, %arg3: memref<128x32xbf16, #tpu.memory_space<vmem>>, %arg4: memref<16x32xf32, #tpu.memory_space<vmem>>) attributes {dimension_semantics = [#tpu.dimension_semantics<parallel>], iteration_bounds = array<i64: 1>, scalar_prefetch = 0 : i64, scratch_operands = 0 : i64, tpu.core_type = #tpu.core_type<tc>, window_params = [{transform_indices = @transform_0, window_bounds = array<i64: 16, 32>}, {pipeline_mode = #tpu.pipeline_mode<synchronous>, transform_indices = @transform_1, window_bounds = array<i64: 32, 128>}, {pipeline_mode = #tpu.pipeline_mode<synchronous>, transform_indices = @transform_2, window_bounds = array<i64: 128, 32>}, {transform_indices = @transform_3, window_bounds = array<i64: 16, 32>}]} {
    %c0 = arith.constant 0 : index
    %c0_0 = arith.constant 0 : index
    %0 = vector.load %arg1[%c0, %c0_0] : memref<16x32xf32, #tpu.memory_space<vmem>>, vector<16x32xf32>
    %1 = arith.truncf %0 : vector<16x32xf32> to vector<16x32xbf16>
    %c0_1 = arith.constant 0 : index
    %c0_2 = arith.constant 0 : index
    %2 = vector.load %arg2[%c0_1, %c0_2] : memref<32x128xbf16, #tpu.memory_space<vmem>>, vector<32x128xbf16>
    %cst = arith.constant dense<0.000000e+00> : vector<16x128xf32>
    %3 = tpu.matmul %1, %2, %cst {dimension_numbers = #tpu.dot_dimension_numbers<[1], [0], [0], [1], [0, 0, 1, 1], [], []>} : vector<16x32xbf16>, vector<32x128xbf16>, vector<16x128xf32> -> vector<16x128xf32>
    %cst_3 = arith.constant 0.000000e+00 : f32
    %4 = vector.broadcast %cst_3 : f32 to vector<16x128xf32>
    %5 = arith.maximumf %3, %4 : vector<16x128xf32>
    %6 = arith.truncf %5 : vector<16x128xf32> to vector<16x128xbf16>
    %c0_4 = arith.constant 0 : index
    %c0_5 = arith.constant 0 : index
    %7 = vector.load %arg3[%c0_4, %c0_5] : memref<128x32xbf16, #tpu.memory_space<vmem>>, vector<128x32xbf16>
    %cst_6 = arith.constant dense<0.000000e+00> : vector<16x32xf32>
    %8 = tpu.matmul %6, %7, %cst_6 {dimension_numbers = #tpu.dot_dimension_numbers<[1], [0], [0], [1], [0, 0, 1, 1], [], []>} : vector<16x128xbf16>, vector<128x32xbf16>, vector<16x32xf32> -> vector<16x32xf32>
    %c0_7 = arith.constant 0 : index
    %c0_8 = arith.constant 0 : index
    %9 = vector.load %arg4[%c0_7, %c0_8] : memref<16x32xf32, #tpu.memory_space<vmem>>, vector<16x32xf32>
    tpu.vector_store %arg4[%c0_7, %c0_8], %8 {strides = array<i32>} : memref<16x32xf32, #tpu.memory_space<vmem>>, vector<16x32xf32>,
    return
  }
  func.func @transform_0(%arg0: i32) -> (i32, i32) {
    %c0_i32 = arith.constant 0 : i32
    %c0_i32_0 = arith.constant 0 : i32
    return %arg0, %c0_i32 : i32, i32
  }
  func.func @transform_1(%arg0: i32) -> (i32, i32) {
    %c0_i32 = arith.constant 0 : i32
    %c0_i32_0 = arith.constant 0 : i32
    %c0_i32_1 = arith.constant 0 : i32
    return %c0_i32, %c0_i32_0 : i32, i32
  }
  func.func @transform_2(%arg0: i32) -> (i32, i32) {
    %c0_i32 = arith.constant 0 : i32
    %c0_i32_0 = arith.constant 0 : i32
    %c0_i32_1 = arith.constant 0 : i32
    return %c0_i32, %c0_i32_0 : i32, i32
  }
  func.func @transform_3(%arg0: i32) -> (i32, i32) {
    %c0_i32 = arith.constant 0 : i32
    %c0_i32_0 = arith.constant 0 : i32
    return %arg0, %c0_i32 : i32, i32
  }
}

</mosaic_0001>

<llo_original>
// kernel: decoder_layer_forward.5
$region0: #{decoder_layer_forward.5}
  #allocation0 [shape = 'u32[]', space=smem, size = 0x4, offset = 0x4, fixed_abs, tag = 'smem constant byte address 0x4 - core index']
  #allocation1 [shape = 'u32[72,128]{1,0:T(1,128)}', space=vmem, size = 0x9000, scoped, tag = 'internal scratch']
  %s0 = inlined_call_operand.vmem [shape: f32[16,32], index: 0, kind: input, shape index: {}]
  %s1 = inlined_call_operand.vmem [shape: bf16[32,128], index: 1, kind: input, shape index: {}]
  %s2 = inlined_call_operand.vmem [shape: bf16[128,32], index: 2, kind: input, shape index: {}]
  %s3 = inlined_call_operand.hbm [shape: f32[16,32], index: 3, kind: output, shape index: {}]
  %s4 = sld [smem:[#allocation0]]
  $region22: #{decoder_layer_forward.5} parent=0
    _
  %s6 = ssub.s32 1, %s4
  %s7 = scalar_select 0, %s6, %s4
  $region1: #{decoder_layer_forward.5} parent=0
    #allocation2 [shape = 'u8[8192]{0}', space=vmem, size = 0x2000, scoped, tag = 'output window, operand 0, single buffered']
    #allocation3 [shape = 's32[1]{0}', space=sflag, size = 0x4, scoped, tag = 'scoped memory for decoder_layer_forward.5']
    %8 = vsyncpa [#allocation3], 0
    // Predicated region
    $region2: #{decoder_layer_forward.5} parent=1 // pred_check
      _
    $region3: #{decoder_layer_forward.5} parent=1 // pred_check_branch
      %10 = sbr.rel (0) target = $region5
    $region4: #{decoder_layer_forward.5} parent=1 // pred_region
      _
    $region5: #{decoder_layer_forward.5} parent=1 // pred_fallthru
      _
    // Predicated region
    $region6: #{decoder_layer_forward.5} parent=1 // pred_check
      _
    $region7: #{decoder_layer_forward.5} parent=1 // pred_check_branch
      %12 = sbr.rel (0) target = $region9
    $region8: #{decoder_layer_forward.5} parent=1 // pred_region
      _
    $region9: #{decoder_layer_forward.5} parent=1 // pred_fallthru
      _
    // Predicated region
    $region10: #{decoder_layer_forward.5} parent=1 // pred_check
      _
    $region11: #{decoder_layer_forward.5} parent=1 // pred_check_branch
      %14 = sbr.rel (0) target = $region13
    $region12: #{decoder_layer_forward.5} parent=1 // pred_region
      _
    $region13: #{decoder_layer_forward.5} parent=1 // pred_fallthru
      _
    %v16 = vld [vmem:[%s0] sm:$0xff]
    %v17 = vld [vmem:[%s0 + $0x8] sm:$0xff]
    %v18 = vpack.c.bf16 %v17, %v16
    %v19 = vld [vmem:[%s1] sm:$0xf]
    %v20 = vld [vmem:[%s1 + $0x4] sm:$0xf]
    %v21 = vld [vmem:[%s1 + $0x8] sm:$0xf]
    %v22 = vld [vmem:[%s1 + $0xc] sm:$0xf]
    %v27 = vunpack.c.l.b16 %v19
    %v28 = vunpack.c.l.b16 %v20
    %v29 = vunpack.c.l.b16 %v21
    %v30 = vunpack.c.l.b16 %v22
    %v31 = vpack.c.b16 %v28, %v27
    %v32 = vpack.c.b16 %v30, %v29
    %vm35 = vcmask 261120
    %v37 = vsel %vm35, %v18, 0
    %39 = vmatpush.bf16.msra.mxu0 0
    %40 = vmatpush.bf16.msra.mxu0 0
    %41 = vmatpush.bf16.msra.mxu0 0
    %42 = vmatpush.bf16.msra.mxu0 0
    %43 = vmatpush.bf16.msra.mxu0 0
    %44 = vmatpush.bf16.msra.mxu0 0
    %45 = vmatpush.bf16.msra.mxu0 %v32
    %46 = vmatpush.bf16.msra.mxu0 %v31
    %47 = vmatmul.bf16.gmra.mxu0 %v37
    %v48 = vpop.f32.mrf.mxu0
    %v49 = vadd.f32 0.0, %v48
    %v50 = vpop.f32.mrf.mxu0
    %v51 = vadd.f32 0.0, %v50
    %52 = vdwg.mxu0
    %v53 = vmax.f32 %v49, 0.0
    %v54 = vmax.f32 %v51, 0.0
    %v55 = vpack.c.bf16 %v54, %v53
    %v56 = vld [vmem:[%s2] sm:$0xf]
    %v57 = vld [vmem:[%s2 + $0x4] sm:$0xf]
    %v58 = vld [vmem:[%s2 + $0x8] sm:$0xf]
    %v59 = vld [vmem:[%s2 + $0xc] sm:$0xf]
    %v60 = vld [vmem:[%s2 + $0x10] sm:$0xf]
    %v61 = vld [vmem:[%s2 + $0x14] sm:$0xf]
    %v62 = vld [vmem:[%s2 + $0x18] sm:$0xf]
    %v63 = vld [vmem:[%s2 + $0x1c] sm:$0xf]
    %v64 = vld [vmem:[%s2 + $0x20] sm:$0xf]
    %v65 = vld [vmem:[%s2 + $0x24] sm:$0xf]
    %v66 = vld [vmem:[%s2 + $0x28] sm:$0xf]
    %v67 = vld [vmem:[%s2 + $0x2c] sm:$0xf]
    %v68 = vld [vmem:[%s2 + $0x30] sm:$0xf]
    %v69 = vld [vmem:[%s2 + $0x34] sm:$0xf]
    %v70 = vld [vmem:[%s2 + $0x38] sm:$0xf]
    %v71 = vld [vmem:[%s2 + $0x3c] sm:$0xf]
    %v88 = vunpack.c.l.b16 %v56
    %v89 = vunpack.c.l.b16 %v57
    %v90 = vunpack.c.l.b16 %v58
    %v91 = vunpack.c.l.b16 %v59
    %v92 = vunpack.c.l.b16 %v60
    %v93 = vunpack.c.l.b16 %v61
    %v94 = vunpack.c.l.b16 %v62
    %v95 = vunpack.c.l.b16 %v63
    %v96 = vunpack.c.l.b16 %v64
    %v97 = vunpack.c.l.b16 %v65
    %v98 = vunpack.c.l.b16 %v66
    %v99 = vunpack.c.l.b16 %v67
    %v100 = vunpack.c.l.b16 %v68
    %v101 = vunpack.c.l.b16 %v69
    %v102 = vunpack.c.l.b16 %v70
    %v103 = vunpack.c.l.b16 %v71
    %v104 = vpack.c.b16 %v89, %v88
    %v105 = vpack.c.b16 %v91, %v90
    %v106 = vpack.c.b16 %v93, %v92
    %v107 = vpack.c.b16 %v95, %v94
    %v108 = vpack.c.b16 %v97, %v96
    %v109 = vpack.c.b16 %v99, %v98
    %v110 = vpack.c.b16 %v101, %v100
    %v111 = vpack.c.b16 %v103, %v102
    %120 = vmatpush.bf16.msra.mxu0 %v111
    %121 = vmatpush.bf16.msra.mxu0 %v110
    %122 = vmatpush.bf16.msra.mxu0 %v109
    %123 = vmatpush.bf16.msra.mxu0 %v108
    %124 = vmatpush.bf16.msra.mxu0 %v107
    %125 = vmatpush.bf16.msra.mxu0 %v106
    %126 = vmatpush.bf16.msra.mxu0 %v105
    %127 = vmatpush.bf16.msra.mxu0 %v104
    %128 = vmatmul.bf16.gmra.mxu0 %v55
    %v129 = vpop.f32.mrf.mxu0
    %v130 = vadd.f32 0.0, %v129
    %v131 = vpop.f32.mrf.mxu0
    %v132 = vadd.f32 0.0, %v131
    %133 = vdwg.mxu0
    %134 = vst.msk [vmem:[#allocation2] sm:$0xff] %vm35, %v130
    %135 = vst.msk [vmem:[#allocation2 + $0x8] sm:$0xff] %vm35, %v132
    // Predicated region
    $region14: #{decoder_layer_forward.5} parent=1 // pred_check
      _
    $region15: #{decoder_layer_forward.5} parent=1 // pred_check_branch
      %137 = sbr.rel (0) target = $region17
    $region16: #{decoder_layer_forward.5} parent=1 // pred_region
      %139 = vsyncadd [#allocation3], 0
      %s140 = sshll.u32 [#allocation2], 4
      %s141 = int_to_ptr.vmem [resolvable:$true] %s140
      %s142 = sshll.u32 %s3, 4
      %s143 = int_to_ptr.hbm [resolvable:$true] %s142
      %148 = dma.vmem_to_hbm [thread:$0]  %s141, 256, %s143, [#allocation3], 128, 128, 8
    $region17: #{decoder_layer_forward.5} parent=1 // pred_fallthru
      _
    // Predicated region
    $region18: #{decoder_layer_forward.5} parent=1 // pred_check
      _
    $region19: #{decoder_layer_forward.5} parent=1 // pred_check_branch
      %150 = sbr.rel (0) target = $region21
    $region20: #{decoder_layer_forward.5} parent=1 // pred_region
      %152 = dma.done [#allocation3], 256
    $region21: #{decoder_layer_forward.5} parent=1 // pred_fallthru
      _
    %153 = vsyncpa [#allocation3], 1

// kernel: decoder_layer_forward.3
$region0: #{decoder_layer_forward.3}
  #allocation0 [shape = 'u32[]', space=smem, size = 0x4, offset = 0x4, fixed_abs, tag = 'smem constant byte address 0x4 - core index']
  #allocation1 [shape = 'u32[72,128]{1,0:T(1,128)}', space=vmem, size = 0x9000, scoped, tag = 'internal scratch']
  %s0 = inlined_call_operand.vmem [shape: f32[2,8,32], index: 0, kind: input, shape index: {}, may-alias: {0,1}]
  %s1 = inlined_call_operand.vmem [shape: f32[2,8,32], index: 1, kind: input, shape index: {}, may-alias: {0,1}]
  %s2 = inlined_call_operand.vmem [shape: bf16[32,32], index: 2, kind: input, shape index: {}]
  %s3 = inlined_call_operand.vmem [shape: bf16[32,64], index: 3, kind: input, shape index: {}]
  %s4 = inlined_call_operand.vmem [shape: bf16[32,32], index: 4, kind: input, shape index: {}]
  %s5 = inlined_call_operand.vmem [shape: f32[2,8,32], index: 5, kind: output, shape index: {}]
  %s6 = sld [smem:[#allocation0]]
  $region53: #{decoder_layer_forward.3} parent=0
    _
  %s8 = ssub.s32 1, %s6
  %s9 = scalar_select 0, %s8, %s6
  loop: start=0, step=1, limit=4
  $region2: #{decoder_layer_forward.3} parent=0 // loop_pre_header
    _
  $region3: #{decoder_layer_forward.3} parent=0 // loop_header
    %s11 = sphi 0, %s15
    %p12 = scmp.ge.s32.totalorder %s11, 4
    %s21 = sphi 0, %s23
    %s24 = sphi 0, %s21
    %s25 = sphi 0, %s24
    %s41 = sphi 0, %s25
    %s47 = sphi 0, %s49
    %s50 = sphi 0, %s47
    %s51 = sphi 0, %s50
    %s67 = sphi 0, %s51
    %s71 = sphi 0, %s71
    %s73 = sphi 0, %s71
    %s74 = sphi 0, %s73
    %s88 = sphi 0, %s74
    %s92 = sphi 0, %s92
    %s94 = sphi 0, %s92
    %s95 = sphi 0, %s94
    %s109 = sphi 0, %s95
    %s113 = sphi 0, %s113
    %s115 = sphi 0, %s113
    %s116 = sphi 0, %s115
    %s130 = sphi 0, %s116
    %s136 = sphi 0, %s138
    %s139 = sphi 0, %s136
    %s140 = sphi 0, %s139
    %s156 = sphi 0, %s140
  $region4: #{decoder_layer_forward.3} parent=0 // loop_header_branch
    %14 = sbr.rel (%p12) target = $region8
  $region5: #{decoder_layer_forward.3} parent=0 // loop_body
    %s16 = ssub.s32 %s11, 1
    %s17 = ssub.s32 %s11, 2
    %s18 = sadd.s32 %s11, 1
    %s19 = ssub.s32 %s11, %s18
    %p20 = scmp.eq.s32.totalorder %s19, 0
    %s22 = sadd.s32 %s21, 1
    %s23 = scalar_select %p20, %s21, %s22
    %p26 = pneg %p20
    %p27 = scmp.eq.s32.totalorder %s11, 1
    %p28 = por %p26, %p27
    %p29 = scmp.ne.s32.totalorder %s21, %s24
    %p30 = scmp.eq.s32.totalorder %s11, 0
    %p31 = por %p29, %p30
    %p32 = scmp.ne.s32.totalorder %s21, %s24
    %p33 = scmp.eq.s32.totalorder %s16, 1
    %p34 = por %p32, %p33
    %p35 = scmp.ne.s32.totalorder %s24, %s25
    %p36 = scmp.eq.s32.totalorder %s16, 0
    %p37 = por %p35, %p36
    %p38 = scmp.ne.s32.totalorder %s24, %s25
    %p39 = scmp.eq.s32.totalorder %s17, 1
    %p40 = por %p38, %p39
    %p42 = scmp.ne.s32.totalorder %s25, %s41
    %p43 = scmp.eq.s32.totalorder %s17, 0
    %p44 = por %p42, %p43
    %s45 = ssub.s32 %s11, %s18
    %p46 = scmp.eq.s32.totalorder %s45, 0
    %s48 = sadd.s32 %s47, 1
    %s49 = scalar_select %p46, %s47, %s48
    %p52 = pneg %p46
    %p53 = scmp.eq.s32.totalorder %s11, 1
    %p54 = por %p52, %p53
    %p55 = scmp.ne.s32.totalorder %s47, %s50
    %p56 = scmp.eq.s32.totalorder %s11, 0
    %p57 = por %p55, %p56
    %p58 = scmp.ne.s32.totalorder %s47, %s50
    %p59 = scmp.eq.s32.totalorder %s16, 1
    %p60 = por %p58, %p59
    %p61 = scmp.ne.s32.totalorder %s50, %s51
    %p62 = scmp.eq.s32.totalorder %s16, 0
    %p63 = por %p61, %p62
    %p64 = scmp.ne.s32.totalorder %s50, %s51
    %p65 = scmp.eq.s32.totalorder %s17, 1
    %p66 = por %p64, %p65
    %p68 = scmp.ne.s32.totalorder %s51, %s67
    %p69 = scmp.eq.s32.totalorder %s17, 0
    %p70 = por %p68, %p69
    %s72 = sadd.s32 %s71, 1
    %p75 = scmp.eq.s32.totalorder %s11, 1
    %p76 = scmp.ne.s32.totalorder %s71, %s73
    %p77 = scmp.eq.s32.totalorder %s11, 0
    %p78 = por %p76, %p77
    %p79 = scmp.ne.s32.totalorder %s71, %s73
    %p80 = scmp.eq.s32.totalorder %s16, 1
    %p81 = por %p79, %p80
    %p82 = scmp.ne.s32.totalorder %s73, %s74
    %p83 = scmp.eq.s32.totalorder %s16, 0
    %p84 = por %p82, %p83
    %p85 = scmp.ne.s32.totalorder %s73, %s74
    %p86 = scmp.eq.s32.totalorder %s17, 1
    %p87 = por %p85, %p86
    %p89 = scmp.ne.s32.totalorder %s74, %s88
    %p90 = scmp.eq.s32.totalorder %s17, 0
    %p91 = por %p89, %p90
    %s93 = sadd.s32 %s92, 1
    %p96 = scmp.eq.s32.totalorder %s11, 1
    %p97 = scmp.ne.s32.totalorder %s92, %s94
    %p98 = scmp.eq.s32.totalorder %s11, 0
    %p99 = por %p97, %p98
    %p100 = scmp.ne.s32.totalorder %s92, %s94
    %p101 = scmp.eq.s32.totalorder %s16, 1
    %p102 = por %p100, %p101
    %p103 = scmp.ne.s32.totalorder %s94, %s95
    %p104 = scmp.eq.s32.totalorder %s16, 0
    %p105 = por %p103, %p104
    %p106 = scmp.ne.s32.totalorder %s94, %s95
    %p107 = scmp.eq.s32.totalorder %s17, 1
    %p108 = por %p106, %p107
    %p110 = scmp.ne.s32.totalorder %s95, %s109
    %p111 = scmp.eq.s32.totalorder %s17, 0
    %p112 = por %p110, %p111
    %s114 = sadd.s32 %s113, 1
    %p117 = scmp.eq.s32.totalorder %s11, 1
    %p118 = scmp.ne.s32.totalorder %s113, %s115
    %p119 = scmp.eq.s32.totalorder %s11, 0
    %p120 = por %p118, %p119
    %p121 = scmp.ne.s32.totalorder %s113, %s115
    %p122 = scmp.eq.s32.totalorder %s16, 1
    %p123 = por %p121, %p122
    %p124 = scmp.ne.s32.totalorder %s115, %s116
    %p125 = scmp.eq.s32.totalorder %s16, 0
    %p126 = por %p124, %p125
    %p127 = scmp.ne.s32.totalorder %s115, %s116
    %p128 = scmp.eq.s32.totalorder %s17, 1
    %p129 = por %p127, %p128
    %p131 = scmp.ne.s32.totalorder %s116, %s130
    %p132 = scmp.eq.s32.totalorder %s17, 0
    %p133 = por %p131, %p132
    %s134 = ssub.s32 %s11, %s18
    %p135 = scmp.eq.s32.totalorder %s134, 0
    %s137 = sadd.s32 %s136, 1
    %s138 = scalar_select %p135, %s136, %s137
    %p141 = pneg %p135
    %p142 = scmp.eq.s32.totalorder %s11, 1
    %p143 = por %p141, %p142
    %p144 = scmp.ne.s32.totalorder %s136, %s139
    %p145 = scmp.eq.s32.totalorder %s11, 0
    %p146 = por %p144, %p145
    %p147 = scmp.ne.s32.totalorder %s136, %s139
    %p148 = scmp.eq.s32.totalorder %s16, 1
    %p149 = por %p147, %p148
    %p150 = scmp.ne.s32.totalorder %s139, %s140
    %p151 = scmp.eq.s32.totalorder %s16, 0
    %p152 = por %p150, %p151
    %p153 = scmp.ne.s32.totalorder %s139, %s140
    %p154 = scmp.eq.s32.totalorder %s17, 1
    %p155 = por %p153, %p154
    %p157 = scmp.ne.s32.totalorder %s140, %s156
    %p158 = scmp.eq.s32.totalorder %s17, 0
    %p159 = por %p157, %p158
    %p160 = scmp.le.s32.totalorder 1, %s11
    %p161 = scmp.lt.s32.totalorder %s11, 3
    %p162 = pnand %p160, %p161
    %p163 = pneg %p162
    // Predicated region
    $region9: #{decoder_layer_forward.3} parent=5 // pred_check
      _
    $region10: #{decoder_layer_forward.3} parent=5 // pred_check_branch
      %165 = sbr.rel (%p162) target = $region12
    $region11: #{decoder_layer_forward.3} parent=5 // pred_region
      %s166 = ssub.s32 %s11, 1
      // Predicated region
      $region13: #{decoder_layer_forward.3} parent=11 // pred_check
        %p167 = pneg %p84
      $region14: #{decoder_layer_forward.3} parent=11 // pred_check_branch
        %169 = sbr.rel (%p167) target = $region16
      $region15: #{decoder_layer_forward.3} parent=11 // pred_region
        _
      $region16: #{decoder_layer_forward.3} parent=11 // pred_fallthru
        _
      // Predicated region
      $region17: #{decoder_layer_forward.3} parent=11 // pred_check
        %p170 = pneg %p105
      $region18: #{decoder_layer_forward.3} parent=11 // pred_check_branch
        %172 = sbr.rel (%p170) target = $region20
      $region19: #{decoder_layer_forward.3} parent=11 // pred_region
        _
      $region20: #{decoder_layer_forward.3} parent=11 // pred_fallthru
        _
      // Predicated region
      $region21: #{decoder_layer_forward.3} parent=11 // pred_check
        %p173 = pneg %p126
      $region22: #{decoder_layer_forward.3} parent=11 // pred_check_branch
        %175 = sbr.rel (%p173) target = $region24
      $region23: #{decoder_layer_forward.3} parent=11 // pred_region
        _
      $region24: #{decoder_layer_forward.3} parent=11 // pred_fallthru
        _
    $region12: #{decoder_layer_forward.3} parent=5 // pred_fallthru
      _
    %p176 = scmp.lt.s32.totalorder %s11, 2
    // Predicated region
    $region25: #{decoder_layer_forward.3} parent=5 // pred_check
      %p177 = pneg %p176
    $region26: #{decoder_layer_forward.3} parent=5 // pred_check_branch
      %179 = sbr.rel (%p177) target = $region28
    $region27: #{decoder_layer_forward.3} parent=5 // pred_region
      // Predicated region
      $region29: #{decoder_layer_forward.3} parent=27 // pred_check
        %p180 = pneg %p31
      $region30: #{decoder_layer_forward.3} parent=27 // pred_check_branch
        %182 = sbr.rel (%p180) target = $region32
      $region31: #{decoder_layer_forward.3} parent=27 // pred_region
        %p183 = scmp.lt.s32.totalorder %s11, 1
        %s184 = scalar_select %p183, %s11, 1
        %s185 = smul.addr %s184, 8
        %s186 = scalar_lea.vmem %s0, %s185
      $region32: #{decoder_layer_forward.3} parent=27 // pred_fallthru
        _
      // Predicated region
      $region33: #{decoder_layer_forward.3} parent=27 // pred_check
        %p187 = pneg %p57
      $region34: #{decoder_layer_forward.3} parent=27 // pred_check_branch
        %189 = sbr.rel (%p187) target = $region36
      $region35: #{decoder_layer_forward.3} parent=27 // pred_region
        %p190 = scmp.lt.s32.totalorder %s11, 1
        %s191 = scalar_select %p190, %s11, 1
        %s192 = smul.addr %s191, 8
        %s193 = scalar_lea.vmem %s1, %s192
      $region36: #{decoder_layer_forward.3} parent=27 // pred_fallthru
        _
    $region28: #{decoder_layer_forward.3} parent=5 // pred_fallthru
      _
    %p194 = scmp.le.s32.totalorder 1, %s11
    %p195 = scmp.lt.s32.totalorder %s11, 3
    %p196 = pnand %p194, %p195
    %p197 = pneg %p196
    // Predicated region
    $region37: #{decoder_layer_forward.3} parent=5 // pred_check
      _
    $region38: #{decoder_layer_forward.3} parent=5 // pred_check_branch
      %199 = sbr.rel (%p196) target = $region40
    $region39: #{decoder_layer_forward.3} parent=5 // pred_region
      %s200 = ssub.s32 %s11, 1
      %p201 = scmp.lt.s32.totalorder %s16, 1
      %s202 = scalar_select %p201, %s16, 1
      %s203 = smul.addr %s202, 8
      %s204 = scalar_lea.vmem %s0, %s203
      %p205 = pneg %p37
      %p206 = pneg %p34
      %p207 = scmp.lt.s32.totalorder %s16, 1
      %s208 = scalar_select %p207, %s16, 1
      %s209 = smul.addr %s208, 8
      %s210 = scalar_lea.vmem %s1, %s209
      %p211 = pneg %p63
      %p212 = pneg %p60
      %p213 = pneg %p84
      %p214 = pneg %p81
      %p215 = pneg %p105
      %p216 = pneg %p102
      %p217 = pneg %p126
      %p218 = pneg %p123
      %p219 = pneg %p152
      %p220 = pneg %p149
      %p221 = scmp.lt.s32.totalorder %s16, 1
      %s222 = scalar_select %p221, %s16, 1
      %s223 = smul.addr %s222, 8
      %s224 = scalar_lea.vmem %s5, %s223
      %p225 = scmp.lt.s32.totalorder %s16, 1
      %s226 = scalar_select %p225, %s16, 1
      %s227 = smul.addr %s226, 8
      %s228 = scalar_lea.vmem %s0, %s227
      %p229 = scmp.lt.s32.totalorder %s16, 1
      %s230 = scalar_select %p229, %s16, 1
      %s231 = smul.addr %s230, 8
      %s232 = scalar_lea.vmem %s1, %s231
      %p233 = scmp.lt.s32.totalorder %s16, 1
      %s234 = scalar_select %p233, %s16, 1
      %s235 = smul.addr %s234, 8
      %s236 = scalar_lea.vmem %s5, %s235
      %v238 = vld [vmem:[%s228] sm:$0xff]
      %v239 = vld [vmem:[%s232] sm:$0xff]
      %v240 = vpack.c.bf16 %v238, %v238
      %v241 = vpack.c.bf16 %v239, %v239
      %v242 = vld [vmem:[%s2] sm:$0xf]
      %v243 = vld [vmem:[%s2 + $0x4] sm:$0xf]
      %v244 = vld [vmem:[%s2 + $0x8] sm:$0xf]
      %v245 = vld [vmem:[%s2 + $0xc] sm:$0xf]
      %v250 = vunpack.c.l.b16 %v242
      %v251 = vunpack.c.l.b16 %v243
      %v252 = vunpack.c.l.b16 %v244
      %v253 = vunpack.c.l.b16 %v245
      %v254 = vpack.c.b16 %v251, %v250
      %v255 = vpack.c.b16 %v253, %v252
      %vm258 = vcmask 261120
      %v260 = vsel %vm258, %v240, 0
      %262 = vmatpush.bf16.msra.mxu0 0
      %263 = vmatpush.bf16.msra.mxu0 0
      %264 = vmatpush.bf16.msra.mxu0 0
      %265 = vmatpush.bf16.msra.mxu0 0
      %266 = vmatpush.bf16.msra.mxu0 0
      %267 = vmatpush.bf16.msra.mxu0 0
      %268 = vmatpush.bf16.msra.mxu0 %v255
      %269 = vmatpush.bf16.msra.mxu0 %v254
      %270 = vmatmul.bf16.gmra.mxu0 %v260
      %v271 = vpop.f32.mrf.mxu0
      %v272 = vadd.f32 0.0, %v271
      %v273 = vpop.f32.mrf.mxu0
      %274 = vdwg.mxu0
      %v275 = vld [vmem:[%s3] sm:$0xf]
      %v276 = vld [vmem:[%s3 + $0x4] sm:$0xf]
      %v277 = vld [vmem:[%s3 + $0x8] sm:$0xf]
      %v278 = vld [vmem:[%s3 + $0xc] sm:$0xf]
      %v283 = vunpack.c.l.b16 %v275
      %v284 = vunpack.c.l.b16 %v276
      %v285 = vunpack.c.l.b16 %v277
      %v286 = vunpack.c.l.b16 %v278
      %v287 = vpack.c.b16 %v284, %v283
      %v288 = vpack.c.b16 %v286, %v285
      %v292 = vsel %vm258, %v241, 0
      %294 = vmatpush.bf16.msra.mxu0 0
      %295 = vmatpush.bf16.msra.mxu0 0
      %296 = vmatpush.bf16.msra.mxu0 0
      %297 = vmatpush.bf16.msra.mxu0 0
      %298 = vmatpush.bf16.msra.mxu0 0
      %299 = vmatpush.bf16.msra.mxu0 0
      %300 = vmatpush.bf16.msra.mxu0 %v288
      %301 = vmatpush.bf16.msra.mxu0 %v287
      %302 = vmatmul.bf16.gmra.mxu0 %v292
      %v303 = vpop.f32.mrf.mxu0
      %v304 = vadd.f32 0.0, %v303
      %v305 = vpop.f32.mrf.mxu0
      %306 = vdwg.mxu0
      %v307 = vpack.c.bf16 %v272, %v272
      %v308 = vpack.c.bf16 %v304, %v304
      %vm309 = vcmask 64512
      %v311 = vsel %vm309, %v307, 0
      %v314 = vsel %vm309, %v308, 0
      %316 = vmatpush.bf16.xpose.msra.mxu0 0
      %317 = vmatpush.bf16.xpose.msra.mxu0 0
      %318 = vmatpush.bf16.xpose.msra.mxu0 0
      %319 = vmatpush.bf16.xpose.msra.mxu0 0
      %320 = vmatpush.bf16.xpose.msra.mxu0 0
      %321 = vmatpush.bf16.xpose.msra.mxu0 0
      %322 = vmatpush.bf16.xpose.msra.mxu0 0
      %323 = vmatpush.bf16.xpose.msra.mxu0 %v314
      %324 = vmatmul.bf16.gmra.mxu0 %v311
      %v325 = vpop.f32.mrf.mxu0
      %v326 = vadd.f32 0.0, %v325
      %v327 = vpop.f32.mrf.mxu0
      %328 = vdwg.mxu0
      %v329 = vmul.f32 %v326, 0.35355338
      %v330 = vsel %vm309, %v329, -inf
      %331 = vmax.xlane.f32.xlu0 %v330
      %v332 = vpop.xlane.xlu0 %331
      %v333 = vsub.f32 %v329, %v332
      %v334 = vmul.f32 %v333, 1.442695
      %v335 = vpow.pop %v334
      %v336 = vsel %vm309, %v335, 0.0
      %337 = vadd.xlane.f32.xlu0 %v336
      %v338 = vpop.xlane.xlu0 %337
      %v339 = vrcp.pop %v338
      %v340 = vmul.f32 %v335, %v339
      %v341 = vpack.c.bf16 %v340, %v340
      %343 = vrot.lane.b32.xlu0 %v308, 96
      %v344 = vpop.permute.xlu0 %343
      %v346 = vsel %vm309, %v341, 0
      %vm348 = vcmask 1043456
      %v350 = vsel %vm348, %v344, 0
      %352 = vmatpush.bf16.msra.mxu0 0
      %353 = vmatpush.bf16.msra.mxu0 0
      %354 = vmatpush.bf16.msra.mxu0 0
      %355 = vmatpush.bf16.msra.mxu0 0
      %356 = vmatpush.bf16.msra.mxu0 0
      %357 = vmatpush.bf16.msra.mxu0 0
      %358 = vmatpush.bf16.msra.mxu0 0
      %359 = vmatpush.bf16.msra.mxu0 %v350
      %360 = vmatmul.bf16.gmra.mxu0 %v346
      %v361 = vpop.f32.mrf.mxu0
      %v362 = vadd.f32 0.0, %v361
      %v363 = vpop.f32.mrf.mxu0
      %364 = vdwg.mxu0
      %366 = vrot.lane.b32.xlu0 %v307, 120
      %v367 = vpop.permute.xlu0 %366
      %368 = vrot.lane.b32.xlu0 %v308, 120
      %v369 = vpop.permute.xlu0 %368
      %v371 = vsel %vm309, %v367, 0
      %v374 = vsel %vm309, %v369, 0
      %376 = vmatpush.bf16.xpose.msra.mxu0 0
      %377 = vmatpush.bf16.xpose.msra.mxu0 0
      %378 = vmatpush.bf16.xpose.msra.mxu0 0
      %379 = vmatpush.bf16.xpose.msra.mxu0 0
      %380 = vmatpush.bf16.xpose.msra.mxu0 0
      %381 = vmatpush.bf16.xpose.msra.mxu0 0
      %382 = vmatpush.bf16.xpose.msra.mxu0 0
      %383 = vmatpush.bf16.xpose.msra.mxu0 %v374
      %384 = vmatmul.bf16.gmra.mxu0 %v371
      %v385 = vpop.f32.mrf.mxu0
      %v386 = vadd.f32 0.0, %v385
      %v387 = vpop.f32.mrf.mxu0
      %388 = vdwg.mxu0
      %v389 = vmul.f32 %v386, 0.35355338
      %v390 = vsel %vm309, %v389, -inf
      %391 = vmax.xlane.f32.xlu0 %v390
      %v392 = vpop.xlane.xlu0 %391
      %v393 = vsub.f32 %v389, %v392
      %v394 = vmul.f32 %v393, 1.442695
      %v395 = vpow.pop %v394
      %v396 = vsel %vm309, %v395, 0.0
      %397 = vadd.xlane.f32.xlu0 %v396
      %v398 = vpop.xlane.xlu0 %397
      %v399 = vrcp.pop %v398
      %v400 = vmul.f32 %v395, %v399
      %v401 = vpack.c.bf16 %v400, %v400
      %402 = vrot.lane.b32.xlu0 %v308, 88
      %v403 = vpop.permute.xlu0 %402
      %v405 = vsel %vm309, %v401, 0
      %v408 = vsel %vm348, %v403, 0
      %410 = vmatpush.bf16.msra.mxu0 0
      %411 = vmatpush.bf16.msra.mxu0 0
      %412 = vmatpush.bf16.msra.mxu0 0
      %413 = vmatpush.bf16.msra.mxu0 0
      %414 = vmatpush.bf16.msra.mxu0 0
      %415 = vmatpush.bf16.msra.mxu0 0
      %416 = vmatpush.bf16.msra.mxu0 0
      %417 = vmatpush.bf16.msra.mxu0 %v408
      %418 = vmatmul.bf16.gmra.mxu0 %v405
      %v419 = vpop.f32.mrf.mxu0
      %v420 = vadd.f32 0.0, %v419
      %v421 = vpop.f32.mrf.mxu0
      %422 = vdwg.mxu0
      %423 = vrot.lane.b32.xlu0 %v307, 112
      %v424 = vpop.permute.xlu0 %423
      %425 = vrot.lane.b32.xlu0 %v308, 112
      %v426 = vpop.permute.xlu0 %425
      %v428 = vsel %vm309, %v424, 0
      %v431 = vsel %vm309, %v426, 0
      %433 = vmatpush.bf16.xpose.msra.mxu0 0
      %434 = vmatpush.bf16.xpose.msra.mxu0 0
      %435 = vmatpush.bf16.xpose.msra.mxu0 0
      %436 = vmatpush.bf16.xpose.msra.mxu0 0
      %437 = vmatpush.bf16.xpose.msra.mxu0 0
      %438 = vmatpush.bf16.xpose.msra.mxu0 0
      %439 = vmatpush.bf16.xpose.msra.mxu0 0
      %440 = vmatpush.bf16.xpose.msra.mxu0 %v431
      %441 = vmatmul.bf16.gmra.mxu0 %v428
      %v442 = vpop.f32.mrf.mxu0
      %v443 = vadd.f32 0.0, %v442
      %v444 = vpop.f32.mrf.mxu0
      %445 = vdwg.mxu0
      %v446 = vmul.f32 %v443, 0.35355338
      %v447 = vsel %vm309, %v446, -inf
      %448 = vmax.xlane.f32.xlu0 %v447
      %v449 = vpop.xlane.xlu0 %448
      %v450 = vsub.f32 %v446, %v449
      %v451 = vmul.f32 %v450, 1.442695
      %v452 = vpow.pop %v451
      %v453 = vsel %vm309, %v452, 0.0
      %454 = vadd.xlane.f32.xlu0 %v453
      %v455 = vpop.xlane.xlu0 %454
      %v456 = vrcp.pop %v455
      %v457 = vmul.f32 %v452, %v456
      %v458 = vpack.c.bf16 %v457, %v457
      %459 = vrot.lane.b32.xlu0 %v308, 80
      %v460 = vpop.permute.xlu0 %459
      %v462 = vsel %vm309, %v458, 0
      %v465 = vsel %vm348, %v460, 0
      %467 = vmatpush.bf16.msra.mxu0 0
      %468 = vmatpush.bf16.msra.mxu0 0
      %469 = vmatpush.bf16.msra.mxu0 0
      %470 = vmatpush.bf16.msra.mxu0 0
      %471 = vmatpush.bf16.msra.mxu0 0
      %472 = vmatpush.bf16.msra.mxu0 0
      %473 = vmatpush.bf16.msra.mxu0 0
      %474 = vmatpush.bf16.msra.mxu0 %v465
      %475 = vmatmul.bf16.gmra.mxu0 %v462
      %v476 = vpop.f32.mrf.mxu0
      %v477 = vadd.f32 0.0, %v476
      %v478 = vpop.f32.mrf.mxu0
      %479 = vdwg.mxu0
      %480 = vrot.lane.b32.xlu0 %v307, 104
      %v481 = vpop.permute.xlu0 %480
      %482 = vrot.lane.b32.xlu0 %v308, 104
      %v483 = vpop.permute.xlu0 %482
      %v485 = vsel %vm309, %v481, 0
      %v488 = vsel %vm309, %v483, 0
      %490 = vmatpush.bf16.xpose.msra.mxu0 0
      %491 = vmatpush.bf16.xpose.msra.mxu0 0
      %492 = vmatpush.bf16.xpose.msra.mxu0 0
      %493 = vmatpush.bf16.xpose.msra.mxu0 0
      %494 = vmatpush.bf16.xpose.msra.mxu0 0
      %495 = vmatpush.bf16.xpose.msra.mxu0 0
      %496 = vmatpush.bf16.xpose.msra.mxu0 0
      %497 = vmatpush.bf16.xpose.msra.mxu0 %v488
      %498 = vmatmul.bf16.gmra.mxu0 %v485
      %v499 = vpop.f32.mrf.mxu0
      %v500 = vadd.f32 0.0, %v499
      %v501 = vpop.f32.mrf.mxu0
      %502 = vdwg.mxu0
      %v503 = vmul.f32 %v500, 0.35355338
      %v504 = vsel %vm309, %v503, -inf
      %505 = vmax.xlane.f32.xlu0 %v504
      %v506 = vpop.xlane.xlu0 %505
      %v507 = vsub.f32 %v503, %v506
      %v508 = vmul.f32 %v507, 1.442695
      %v509 = vpow.pop %v508
      %v510 = vsel %vm309, %v509, 0.0
      %511 = vadd.xlane.f32.xlu0 %v510
      %v512 = vpop.xlane.xlu0 %511
      %v513 = vrcp.pop %v512
      %v514 = vmul.f32 %v509, %v513
      %v515 = vpack.c.bf16 %v514, %v514
      %516 = vrot.lane.b32.xlu0 %v308, 72
      %v517 = vpop.permute.xlu0 %516
      %v519 = vsel %vm309, %v515, 0
      %v522 = vsel %vm348, %v517, 0
      %524 = vmatpush.bf16.msra.mxu0 0
      %525 = vmatpush.bf16.msra.mxu0 0
      %526 = vmatpush.bf16.msra.mxu0 0
      %527 = vmatpush.bf16.msra.mxu0 0
      %528 = vmatpush.bf16.msra.mxu0 0
      %529 = vmatpush.bf16.msra.mxu0 0
      %530 = vmatpush.bf16.msra.mxu0 0
      %531 = vmatpush.bf16.msra.mxu0 %v522
      %532 = vmatmul.bf16.gmra.mxu0 %v519
      %v533 = vpop.f32.mrf.mxu0
      %v534 = vadd.f32 0.0, %v533
      %v535 = vpop.f32.mrf.mxu0
      %536 = vdwg.mxu0
      %538 = vrot.lane.b32.xlu0 %v420, 8
      %v539 = vpop.permute.xlu0 %538
      %542 = vrot.lane.b32.xlu0 %v477, 16
      %v543 = vpop.permute.xlu0 %542
      %546 = vrot.lane.b32.xlu0 %v534, 24
      %v547 = vpop.permute.xlu0 %546
      %v549 = vsel %vm309, %v362, %v539
      %vm550 = vcmask 130048
      %v551 = vsel %vm550, %v549, %v543
      %vm552 = vcmask 195584
      %v553 = vsel %vm552, %v551, %v547
      %v554 = vpack.c.bf16 %v553, %v553
      %v555 = vld [vmem:[%s4] sm:$0xf]
      %v556 = vld [vmem:[%s4 + $0x4] sm:$0xf]
      %v557 = vld [vmem:[%s4 + $0x8] sm:$0xf]
      %v558 = vld [vmem:[%s4 + $0xc] sm:$0xf]
      %v563 = vunpack.c.l.b16 %v555
      %v564 = vunpack.c.l.b16 %v556
      %v565 = vunpack.c.l.b16 %v557
      %v566 = vunpack.c.l.b16 %v558
      %v567 = vpack.c.b16 %v564, %v563
      %v568 = vpack.c.b16 %v566, %v565
      %v572 = vsel %vm258, %v554, 0
      %574 = vmatpush.bf16.msra.mxu0 0
      %575 = vmatpush.bf16.msra.mxu0 0
      %576 = vmatpush.bf16.msra.mxu0 0
      %577 = vmatpush.bf16.msra.mxu0 0
      %578 = vmatpush.bf16.msra.mxu0 0
      %579 = vmatpush.bf16.msra.mxu0 0
      %580 = vmatpush.bf16.msra.mxu0 %v568
      %581 = vmatpush.bf16.msra.mxu0 %v567
      %582 = vmatmul.bf16.gmra.mxu0 %v572
      %v583 = vpop.f32.mrf.mxu0
      %v584 = vadd.f32 0.0, %v583
      %v585 = vpop.f32.mrf.mxu0
      %586 = vdwg.mxu0
      %v587 = vadd.f32 %v238, %v584
      %588 = vst.msk [vmem:[%s236] sm:$0xff] %vm258, %v587
      %p589 = scmp.lt.s32.totalorder %s16, 1
      %s590 = scalar_select %p589, %s16, 1
      %s591 = smul.addr %s590, 8
      %s592 = scalar_lea.vmem %s5, %s591
      // Predicated region
      $region41: #{decoder_layer_forward.3} parent=39 // pred_check
        %p593 = pneg %p149
      $region42: #{decoder_layer_forward.3} parent=39 // pred_check_branch
        %595 = sbr.rel (%p593) target = $region44
      $region43: #{decoder_layer_forward.3} parent=39 // pred_region
        _
      $region44: #{decoder_layer_forward.3} parent=39 // pred_fallthru
        _
    $region40: #{decoder_layer_forward.3} parent=5 // pred_fallthru
      _
    %p596 = scmp.le.s32.totalorder 2, %s11
    // Predicated region
    $region45: #{decoder_layer_forward.3} parent=5 // pred_check
      %p597 = pneg %p596
    $region46: #{decoder_layer_forward.3} parent=5 // pred_check_branch
      %599 = sbr.rel (%p597) target = $region48
    $region47: #{decoder_layer_forward.3} parent=5 // pred_region
      %s600 = ssub.s32 %s11, 2
      // Predicated region
      $region49: #{decoder_layer_forward.3} parent=47 // pred_check
        %p601 = pneg %p155
      $region50: #{decoder_layer_forward.3} parent=47 // pred_check_branch
        %603 = sbr.rel (%p601) target = $region52
      $region51: #{decoder_layer_forward.3} parent=47 // pred_region
        %p604 = scmp.lt.s32.totalorder %s17, 1
        %s605 = scalar_select %p604, %s17, 1
        %s606 = smul.addr %s605, 8
        %s607 = scalar_lea.vmem %s5, %s606
      $region52: #{decoder_layer_forward.3} parent=47 // pred_fallthru
        _
    $region48: #{decoder_layer_forward.3} parent=5 // pred_fallthru
      _
  $region6: #{decoder_layer_forward.3} parent=0 // loop_footer
    %s15 = sadd.s32 1, %s11
  $region7: #{decoder_layer_forward.3} parent=0 // loop_footer_branch
    %10 = sbr.rel target = $region3
  $region8: #{decoder_layer_forward.3} parent=0 // loop_exit
    _

</llo_original>
